<compile_context>
chip_gen: v5e
topology: v5e:2x2
jax: 0.10.0
libtpu: 0.0.40
codegen_flags: <defaults>
</compile_context>

<pallas_src>
import jax
import jax.numpy as jnp
from jax.experimental import pallas as pl
from jax.experimental.pallas import tpu as pltpu


def _round_up(n, m):
    return ((n + m - 1) // m) * m


def _mlp_kernel(x_ref, w1_ref, b1_ref, w2_ref, b2_ref, o_ref):
    # fc1 (bf16 operands, f32 MXU accumulation) + bias + ReLU on f32.
    h = jnp.dot(x_ref[...], w1_ref[...], preferred_element_type=jnp.float32)
    h = jnp.maximum(h + b1_ref[...], 0.0)          # b1 is (1, hidden) -> broadcasts over batch
    # dropout1(p=0.5): identity in eval mode (no masking / no scaling).
    # fc4: cast the f32 activation to the weight dtype (bf16) for the MXU,
    # keep f32 accumulation; bias add stays f32.
    out = jnp.dot(h.astype(w2_ref.dtype), w2_ref[...],
                  preferred_element_type=jnp.float32)
    out = out + b2_ref[...]                        # b2 is (1, out_pad)
    o_ref[...] = out.astype(o_ref.dtype)


def regression_model1_forward(x, w1, b1, w2, b2, *, tile_b=None, use_bf16=True):
    """x: (B, input_dim); w1: (input_dim, hidden); b1: (hidden,);
    w2: (hidden, output_dim); b2: (output_dim,). Returns (B, output_dim)."""
    B, in_dim = x.shape
    hidden = w1.shape[1]
    out_dim = w2.shape[1]
    out_dtype = x.dtype

    # --- lane-dense output padding (out_dim -> multiple of 128) ---
    out_pad = _round_up(max(out_dim, 128), 128)

    # --- batch tile selection ---
    # Multiple of 8 (f32/bf16 sublane rule), capped at 2048 rows so the
    # double-buffered x + out tiles (~1.2 KB/row) stay far below every
    # generation's scoped VMEM default (16 MiB on v5e, 32 MiB on v6e/v7x).
    MAX_TILE_B = 2048
    if tile_b is None:
        tile_b = min(MAX_TILE_B, _round_up(B, 8))
    tile_b = max(8, _round_up(tile_b, 8))

    # Pad batch so the grid covers it exactly; padded rows are sliced off below.
    B_pad = _round_up(B, tile_b)
    if B_pad != B:
        x = jnp.pad(x, ((0, B_pad - B), (0, 0)))

    # --- operand dtypes ---
    mm_dtype = jnp.bfloat16 if use_bf16 else x.dtype
    x_mm = x.astype(mm_dtype)
    w1_mm = w1.astype(mm_dtype)
    w2_mm = jnp.pad(w2, ((0, 0), (0, out_pad - out_dim))).astype(mm_dtype)
    b1_2d = b1.reshape(1, hidden).astype(jnp.float32)
    b2_2d = jnp.pad(b2, (0, out_pad - out_dim)).reshape(1, out_pad).astype(jnp.float32)

    grid = (B_pad // tile_b,)
    out = pl.pallas_call(
        _mlp_kernel,
        out_shape=jax.ShapeDtypeStruct((B_pad, out_pad), out_dtype),
        grid_spec=pltpu.PrefetchScalarGridSpec(
            num_scalar_prefetch=0,
            grid=grid,
            in_specs=[
                pl.BlockSpec((tile_b, in_dim), lambda i: (i, 0)),    # x tile over batch
                pl.BlockSpec((in_dim, hidden), lambda i: (0, 0)),    # W1 (resident)
                pl.BlockSpec((1, hidden), lambda i: (0, 0)),         # b1 (resident)
                pl.BlockSpec((hidden, out_pad), lambda i: (0, 0)),   # W2 (resident, lane-padded)
                pl.BlockSpec((1, out_pad), lambda i: (0, 0)),        # b2 (resident, lane-padded)
            ],
            out_specs=pl.BlockSpec((tile_b, out_pad), lambda i: (i, 0)),
        ),
        compiler_params=pltpu.CompilerParams(
            dimension_semantics=("parallel",)),
    )(x_mm, w1_mm, b1_2d, w2_mm, b2_2d)

    return out[:B, :out_dim]


def _reference(x, w1, b1, w2, b2):
    # Pure-JAX f32 reference with the same semantics as the PyTorch eval forward.
    return jnp.maximum(x @ w1 + b1, 0.0) @ w2 + b2


if __name__ == "__main__":
    # Shapes consistent with the module: input_dim=32, hidden=64, output_dim=8.
    input_dim, reg_hidden_dim, output_dim = 32, 64, 8

    key = jax.random.PRNGKey(0)
    kx, kw1, kb1, kw2, kb2, kx2 = jax.random.split(key, 6)

    # Deterministic synthetic parameters (PyTorch-style uniform fan-in scaling).
    lim1 = 1.0 / jnp.sqrt(input_dim)
    lim2 = 1.0 / jnp.sqrt(reg_hidden_dim)
    w1 = jax.random.uniform(kw1, (input_dim, reg_hidden_dim), jnp.float32, -lim1, lim1)
    b1 = jax.random.uniform(kb1, (reg_hidden_dim,), jnp.float32, -lim1, lim1)
    w2 = jax.random.uniform(kw2, (reg_hidden_dim, output_dim), jnp.float32, -lim2, lim2)
    b2 = jax.random.uniform(kb2, (output_dim,), jnp.float32, -lim2, lim2)

    # Case 1: tiny batch (single grid step).
    B1 = 8
    x1 = jax.random.normal(kx, (B1, input_dim), dtype=jnp.float32)
    out1 = jax.block_until_ready(regression_model1_forward(x1, w1, b1, w2, b2))
    ref1 = _reference(x1, w1, b1, w2, b2)
    assert out1.shape == (B1, output_dim)
    # bf16 matmul operands with f32 accumulation -> compare to f32 ref at bf16 tolerance.
    assert jnp.allclose(out1, ref1, atol=3e-2, rtol=3e-2)

    # Case 2: batch not divisible by the tile (exercises padding + multi-step grid).
    B2 = 200
    x2 = jax.random.normal(kx2, (B2, input_dim), dtype=jnp.float32)
    out2 = jax.block_until_ready(
        regression_model1_forward(x2, w1, b1, w2, b2, tile_b=64))
    ref2 = _reference(x2, w1, b1, w2, b2)
    assert out2.shape == (B2, output_dim)
    assert jnp.allclose(out2, ref2, atol=3e-2, rtol=3e-2)

    print("KERNEL_OK")
</pallas_src>

<mosaic_0001>
module attributes {stable_mosaic.version = 11 : i64} {
  func.func @_mlp_kernel(%arg0: i32, %arg1: memref<8x32xbf16, #tpu.memory_space<vmem>>, %arg2: memref<32x64xbf16, #tpu.memory_space<vmem>>, %arg3: memref<1x64xf32, #tpu.memory_space<vmem>>, %arg4: memref<64x128xbf16, #tpu.memory_space<vmem>>, %arg5: memref<1x128xf32, #tpu.memory_space<vmem>>, %arg6: memref<8x128xf32, #tpu.memory_space<vmem>>) attributes {dimension_semantics = [#tpu.dimension_semantics<parallel>], iteration_bounds = array<i64: 1>, scalar_prefetch = 0 : i64, scratch_operands = 0 : i64, tpu.core_type = #tpu.core_type<tc>, window_params = [{transform_indices = @transform_0, window_bounds = array<i64: 8, 32>}, {pipeline_mode = #tpu.pipeline_mode<synchronous>, transform_indices = @transform_1, window_bounds = array<i64: 32, 64>}, {pipeline_mode = #tpu.pipeline_mode<synchronous>, transform_indices = @transform_2, window_bounds = array<i64: 1, 64>}, {pipeline_mode = #tpu.pipeline_mode<synchronous>, transform_indices = @transform_3, window_bounds = array<i64: 64, 128>}, {pipeline_mode = #tpu.pipeline_mode<synchronous>, transform_indices = @transform_4, window_bounds = array<i64: 1, 128>}, {transform_indices = @transform_5, window_bounds = array<i64: 8, 128>}]} {
    %c0 = arith.constant 0 : index
    %c0_0 = arith.constant 0 : index
    %0 = vector.load %arg1[%c0, %c0_0] : memref<8x32xbf16, #tpu.memory_space<vmem>>, vector<8x32xbf16>
    %c0_1 = arith.constant 0 : index
    %c0_2 = arith.constant 0 : index
    %1 = vector.load %arg2[%c0_1, %c0_2] : memref<32x64xbf16, #tpu.memory_space<vmem>>, vector<32x64xbf16>
    %cst = arith.constant dense<0.000000e+00> : vector<8x64xf32>
    %2 = tpu.matmul %0, %1, %cst {dimension_numbers = #tpu.dot_dimension_numbers<[1], [0], [0], [1], [0, 0, 1, 1], [], []>} : vector<8x32xbf16>, vector<32x64xbf16>, vector<8x64xf32> -> vector<8x64xf32>
    %c0_3 = arith.constant 0 : index
    %c0_4 = arith.constant 0 : index
    %3 = vector.load %arg3[%c0_3, %c0_4] : memref<1x64xf32, #tpu.memory_space<vmem>>, vector<1x64xf32>
    %4 = vector.broadcast %3 : vector<1x64xf32> to vector<8x64xf32>
    %5 = arith.addf %2, %4 : vector<8x64xf32>
    %cst_5 = arith.constant 0.000000e+00 : f32
    %6 = vector.broadcast %cst_5 : f32 to vector<8x64xf32>
    %7 = arith.maximumf %5, %6 : vector<8x64xf32>
    %8 = arith.truncf %7 : vector<8x64xf32> to vector<8x64xbf16>
    %c0_6 = arith.constant 0 : index
    %c0_7 = arith.constant 0 : index
    %9 = vector.load %arg4[%c0_6, %c0_7] : memref<64x128xbf16, #tpu.memory_space<vmem>>, vector<64x128xbf16>
    %cst_8 = arith.constant dense<0.000000e+00> : vector<8x128xf32>
    %10 = tpu.matmul %8, %9, %cst_8 {dimension_numbers = #tpu.dot_dimension_numbers<[1], [0], [0], [1], [0, 0, 1, 1], [], []>} : vector<8x64xbf16>, vector<64x128xbf16>, vector<8x128xf32> -> vector<8x128xf32>
    %c0_9 = arith.constant 0 : index
    %c0_10 = arith.constant 0 : index
    %11 = vector.load %arg5[%c0_9, %c0_10] : memref<1x128xf32, #tpu.memory_space<vmem>>, vector<1x128xf32>
    %12 = vector.broadcast %11 : vector<1x128xf32> to vector<8x128xf32>
    %13 = arith.addf %10, %12 : vector<8x128xf32>
    %c0_11 = arith.constant 0 : index
    %c0_12 = arith.constant 0 : index
    %14 = vector.load %arg6[%c0_11, %c0_12] : memref<8x128xf32, #tpu.memory_space<vmem>>, vector<8x128xf32>
    tpu.vector_store %arg6[%c0_11, %c0_12], %13 {strides = array<i32>} : memref<8x128xf32, #tpu.memory_space<vmem>>, vector<8x128xf32>,
    return
  }
  func.func @transform_0(%arg0: i32) -> (i32, i32) {
    %c0_i32 = arith.constant 0 : i32
    %c0_i32_0 = arith.constant 0 : i32
    return %arg0, %c0_i32 : i32, i32
  }
  func.func @transform_1(%arg0: i32) -> (i32, i32) {
    %c0_i32 = arith.constant 0 : i32
    %c0_i32_0 = arith.constant 0 : i32
    %c0_i32_1 = arith.constant 0 : i32
    return %c0_i32, %c0_i32_0 : i32, i32
  }
  func.func @transform_2(%arg0: i32) -> (i32, i32) {
    %c0_i32 = arith.constant 0 : i32
    %c0_i32_0 = arith.constant 0 : i32
    %c0_i32_1 = arith.constant 0 : i32
    return %c0_i32, %c0_i32_0 : i32, i32
  }
  func.func @transform_3(%arg0: i32) -> (i32, i32) {
    %c0_i32 = arith.constant 0 : i32
    %c0_i32_0 = arith.constant 0 : i32
    %c0_i32_1 = arith.constant 0 : i32
    return %c0_i32, %c0_i32_0 : i32, i32
  }
  func.func @transform_4(%arg0: i32) -> (i32, i32) {
    %c0_i32 = arith.constant 0 : i32
    %c0_i32_0 = arith.constant 0 : i32
    %c0_i32_1 = arith.constant 0 : i32
    return %c0_i32, %c0_i32_0 : i32, i32
  }
  func.func @transform_5(%arg0: i32) -> (i32, i32) {
    %c0_i32 = arith.constant 0 : i32
    %c0_i32_0 = arith.constant 0 : i32
    return %arg0, %c0_i32 : i32, i32
  }
}

</mosaic_0001>

<llo_original>
// kernel: tpu_custom_call.1
$region0: #{tpu_custom_call.1}
  #allocation0 [shape = 'u32[]', space=smem, size = 0x4, offset = 0x4, fixed_abs, tag = 'smem constant byte address 0x4 - core index']
  #allocation1 [shape = 'u32[72,128]{1,0:T(1,128)}', space=vmem, size = 0x9000, scoped, tag = 'internal scratch']
  %s0 = inlined_call_operand.hbm [shape: bf16[8,32], index: 0, kind: input, shape index: {}]
  %s1 = inlined_call_operand.hbm [shape: bf16[32,64], index: 1, kind: input, shape index: {}]
  %s2 = inlined_call_operand.vmem [shape: f32[1,64], index: 2, kind: input, shape index: {}]
  %s3 = inlined_call_operand.hbm [shape: bf16[64,128], index: 3, kind: input, shape index: {}]
  %s4 = inlined_call_operand.vmem [shape: f32[1,128], index: 4, kind: input, shape index: {}]
  %s5 = inlined_call_operand.hbm [shape: f32[8,128], index: 5, kind: output, shape index: {}]
  %s6 = sld [smem:[#allocation0]]
  $region42: #{tpu_custom_call.1} parent=0
    _
  %s8 = ssub.s32 1, %s6
  %s9 = scalar_select 0, %s8, %s6
  $region1: #{tpu_custom_call.1} parent=0
    #allocation2 [shape = 'u8[2048]{0}', space=vmem, size = 0x800, scoped, tag = 'input window, operand 0, single buffered']
    #allocation3 [shape = 's32[1]{0}', space=sflag, size = 0x4, scoped, tag = 'scoped memory for tpu_custom_call.1']
    #allocation4 [shape = 's32[1]{0}', space=sflag, size = 0x4, scoped, tag = 'scoped memory for tpu_custom_call.1']
    #allocation5 [shape = 'u8[8192]{0}', space=vmem, size = 0x2000, scoped, tag = 'input window, operand 1, single buffered']
    #allocation6 [shape = 's32[1]{0}', space=sflag, size = 0x4, scoped, tag = 'scoped memory for tpu_custom_call.1']
    #allocation7 [shape = 'u8[16384]{0}', space=vmem, size = 0x4000, scoped, tag = 'input window, operand 3, single buffered']
    #allocation8 [shape = 'u8[4096]{0}', space=vmem, size = 0x1000, scoped, tag = 'output window, operand 0, single buffered']
    %10 = vsyncpa [#allocation3], 0
    %11 = vsyncpa [#allocation6], 0
    %12 = vsyncpa [#allocation4], 0
    // Predicated region
    $region2: #{tpu_custom_call.1} parent=1 // pred_check
      _
    $region3: #{tpu_custom_call.1} parent=1 // pred_check_branch
      %14 = sbr.rel (0) target = $region5
    $region4: #{tpu_custom_call.1} parent=1 // pred_region
      %16 = vsyncadd [#allocation3], 0
      %s18 = sshll.u32 %s0, 4
      %s19 = int_to_ptr.hbm [resolvable:$true] %s18
      %s20 = sshll.u32 [#allocation2], 4
      %s21 = int_to_ptr.vmem [resolvable:$true] %s20
      %23 = dma.hbm_to_vmem [thread:$0]  %s19, 64, %s21, [#allocation3]
    $region5: #{tpu_custom_call.1} parent=1 // pred_fallthru
      _
    // Predicated region
    $region6: #{tpu_custom_call.1} parent=1 // pred_check
      _
    $region7: #{tpu_custom_call.1} parent=1 // pred_check_branch
      %25 = sbr.rel (0) target = $region9
    $region8: #{tpu_custom_call.1} parent=1 // pred_region
      %27 = vsyncadd [#allocation6], 0
      %s28 = sshll.u32 %s1, 4
      %s29 = int_to_ptr.hbm [resolvable:$true] %s28
      %s30 = sshll.u32 [#allocation5], 4
      %s31 = int_to_ptr.vmem [resolvable:$true] %s30
      %36 = dma.hbm_to_vmem [thread:$0]  %s29, 256, %s31, [#allocation6], 64, 64, 4
    $region9: #{tpu_custom_call.1} parent=1 // pred_fallthru
      _
    // Predicated region
    $region10: #{tpu_custom_call.1} parent=1 // pred_check
      _
    $region11: #{tpu_custom_call.1} parent=1 // pred_check_branch
      %38 = sbr.rel (0) target = $region13
    $region12: #{tpu_custom_call.1} parent=1 // pred_region
      _
    $region13: #{tpu_custom_call.1} parent=1 // pred_fallthru
      _
    // Predicated region
    $region14: #{tpu_custom_call.1} parent=1 // pred_check
      _
    $region15: #{tpu_custom_call.1} parent=1 // pred_check_branch
      %40 = sbr.rel (0) target = $region17
    $region16: #{tpu_custom_call.1} parent=1 // pred_region
      %42 = vsyncadd [#allocation6], 0
      %s43 = sshll.u32 %s3, 4
      %s44 = int_to_ptr.hbm [resolvable:$true] %s43
      %s45 = sshll.u32 [#allocation7], 4
      %s46 = int_to_ptr.vmem [resolvable:$true] %s45
      %51 = dma.hbm_to_vmem [thread:$0]  %s44, 512, %s46, [#allocation6], 64, 64, 4
    $region17: #{tpu_custom_call.1} parent=1 // pred_fallthru
      _
    // Predicated region
    $region18: #{tpu_custom_call.1} parent=1 // pred_check
      _
    $region19: #{tpu_custom_call.1} parent=1 // pred_check_branch
      %53 = sbr.rel (0) target = $region21
    $region20: #{tpu_custom_call.1} parent=1 // pred_region
      _
    $region21: #{tpu_custom_call.1} parent=1 // pred_fallthru
      _
    // Predicated region
    $region22: #{tpu_custom_call.1} parent=1 // pred_check
      _
    $region23: #{tpu_custom_call.1} parent=1 // pred_check_branch
      %55 = sbr.rel (0) target = $region25
    $region24: #{tpu_custom_call.1} parent=1 // pred_region
      %57 = dma.done [#allocation3], 64
    $region25: #{tpu_custom_call.1} parent=1 // pred_fallthru
      _
    // Predicated region
    $region26: #{tpu_custom_call.1} parent=1 // pred_check
      _
    $region27: #{tpu_custom_call.1} parent=1 // pred_check_branch
      %59 = sbr.rel (0) target = $region29
    $region28: #{tpu_custom_call.1} parent=1 // pred_region
      %61 = dma.done [#allocation6], 256
    $region29: #{tpu_custom_call.1} parent=1 // pred_fallthru
      _
    // Predicated region
    $region30: #{tpu_custom_call.1} parent=1 // pred_check
      _
    $region31: #{tpu_custom_call.1} parent=1 // pred_check_branch
      %63 = sbr.rel (0) target = $region33
    $region32: #{tpu_custom_call.1} parent=1 // pred_region
      %65 = dma.done [#allocation6], 512
    $region33: #{tpu_custom_call.1} parent=1 // pred_fallthru
      _
    %v67 = vld [vmem:[#allocation2] sm:$0xf]
    %v68 = vld [vmem:[#allocation5] sm:$0xf]
    %v69 = vld [vmem:[#allocation5 + $0x4] sm:$0xf]
    %v70 = vld [vmem:[#allocation5 + $0x8] sm:$0xf]
    %v71 = vld [vmem:[#allocation5 + $0xc] sm:$0xf]
    %v72 = vld [vmem:[%s2] sm:$0x1]
    %v74 = vperm.slane %v72, 0
    %v80 = vunpack.c.l.b16 %v68
    %v81 = vunpack.c.l.b16 %v69
    %v82 = vunpack.c.l.b16 %v70
    %v83 = vunpack.c.l.b16 %v71
    %v84 = vpack.c.b16 %v81, %v80
    %v85 = vpack.c.b16 %v83, %v82
    %vm88 = vcmask 261120
    %v90 = vsel %vm88, %v67, 0
    %92 = vmatpush.bf16.msra.mxu0 0
    %93 = vmatpush.bf16.msra.mxu0 0
    %94 = vmatpush.bf16.msra.mxu0 0
    %95 = vmatpush.bf16.msra.mxu0 0
    %96 = vmatpush.bf16.msra.mxu0 0
    %97 = vmatpush.bf16.msra.mxu0 0
    %98 = vmatpush.bf16.msra.mxu0 %v85
    %99 = vmatpush.bf16.msra.mxu0 %v84
    %100 = vmatmul.bf16.gmra.mxu0 %v90
    %v101 = vpop.f32.mrf.mxu0
    %v102 = vadd.f32 %v74, %v101
    %v103 = vpop.f32.mrf.mxu0
    %104 = vdwg.mxu0
    %v105 = vmax.f32 %v102, 0.0
    %v106 = vpack.c.bf16 %v105, %v105
    %v107 = vld [vmem:[#allocation7] sm:$0xf]
    %v108 = vld [vmem:[#allocation7 + $0x4] sm:$0xf]
    %v109 = vld [vmem:[#allocation7 + $0x8] sm:$0xf]
    %v110 = vld [vmem:[#allocation7 + $0xc] sm:$0xf]
    %v111 = vld [vmem:[#allocation7 + $0x10] sm:$0xf]
    %v112 = vld [vmem:[#allocation7 + $0x14] sm:$0xf]
    %v113 = vld [vmem:[#allocation7 + $0x18] sm:$0xf]
    %v114 = vld [vmem:[#allocation7 + $0x1c] sm:$0xf]
    %v115 = vld [vmem:[%s4] sm:$0x1]
    %v117 = vperm.slane %v115, 0
    %v127 = vunpack.c.l.b16 %v107
    %v128 = vunpack.c.l.b16 %v108
    %v129 = vunpack.c.l.b16 %v109
    %v130 = vunpack.c.l.b16 %v110
    %v131 = vunpack.c.l.b16 %v111
    %v132 = vunpack.c.l.b16 %v112
    %v133 = vunpack.c.l.b16 %v113
    %v134 = vunpack.c.l.b16 %v114
    %v135 = vpack.c.b16 %v128, %v127
    %v136 = vpack.c.b16 %v130, %v129
    %v137 = vpack.c.b16 %v132, %v131
    %v138 = vpack.c.b16 %v134, %v133
    %vm143 = vcmask 523264
    %v145 = vsel %vm143, %v106, 0
    %147 = vmatpush.bf16.msra.mxu0 0
    %148 = vmatpush.bf16.msra.mxu0 0
    %149 = vmatpush.bf16.msra.mxu0 0
    %150 = vmatpush.bf16.msra.mxu0 0
    %151 = vmatpush.bf16.msra.mxu0 %v138
    %152 = vmatpush.bf16.msra.mxu0 %v137
    %153 = vmatpush.bf16.msra.mxu0 %v136
    %154 = vmatpush.bf16.msra.mxu0 %v135
    %155 = vmatmul.bf16.gmra.mxu0 %v145
    %v156 = vpop.f32.mrf.mxu0
    %v157 = vadd.f32 %v117, %v156
    %v158 = vpop.f32.mrf.mxu0
    %159 = vdwg.mxu0
    %160 = vst [vmem:[#allocation8] sm:$0xff] %v157
    // Predicated region
    $region34: #{tpu_custom_call.1} parent=1 // pred_check
      _
    $region35: #{tpu_custom_call.1} parent=1 // pred_check_branch
      %162 = sbr.rel (0) target = $region37
    $region36: #{tpu_custom_call.1} parent=1 // pred_region
      %164 = vsyncadd [#allocation4], 0
      %s166 = sshll.u32 [#allocation8], 4
      %s167 = int_to_ptr.vmem [resolvable:$true] %s166
      %s168 = sshll.u32 %s5, 4
      %s169 = int_to_ptr.hbm [resolvable:$true] %s168
      %171 = dma.vmem_to_hbm [thread:$0]  %s167, 128, %s169, [#allocation4]
    $region37: #{tpu_custom_call.1} parent=1 // pred_fallthru
      _
    // Predicated region
    $region38: #{tpu_custom_call.1} parent=1 // pred_check
      _
    $region39: #{tpu_custom_call.1} parent=1 // pred_check_branch
      %173 = sbr.rel (0) target = $region41
    $region40: #{tpu_custom_call.1} parent=1 // pred_region
      %175 = dma.done [#allocation4], 128
    $region41: #{tpu_custom_call.1} parent=1 // pred_fallthru
      _
    %176 = vsyncpa [#allocation3], 1
    %177 = vsyncpa [#allocation6], 1
    %178 = vsyncpa [#allocation4], 1

</llo_original>
